<compile_context>
chip_gen: v7x
topology: tpu7x:2x2x1
jax: 0.10.0
libtpu: 0.0.40
codegen_flags: <defaults>
</compile_context>

<pallas_src>
import functools

import jax
import jax.numpy as jnp
from jax import lax
from jax.experimental import pallas as pl
from jax.experimental.pallas import tpu as pltpu


_LANE = 128
_MAX_BLOCK_ROWS = 4096   # 4096 x 128 x 4 B = 2 MiB per f32 input block


def _round_up(x, m):
    return ((x + m - 1) // m) * m


def _huber_kernel(depth_ref, gt_ref, psum_ref, pcnt_ref, acc_sum, acc_cnt,
                  *, delta, r_total, r_tile):
    j = pl.program_id(1)

    @pl.when(j == 0)
    def _init():
        acc_sum[...] = jnp.zeros_like(acc_sum)
        acc_cnt[...] = jnp.zeros_like(acc_cnt)

    # Upcast per block (no-op for f32 inputs; keeps math/accumulation in f32).
    depth = depth_ref[...].astype(jnp.float32)      # (r_tile, 128)
    gt = gt_ref[...].astype(jnp.float32)

    mask = gt > 0.0
    if r_total % r_tile != 0:
        # Ragged last row-block: mask out rows past the real extent so that
        # garbage in the OOB part of the block can never enter the reduction.
        row = lax.broadcasted_iota(jnp.int32, depth.shape, 0)
        mask = jnp.logical_and(mask, (j * r_tile + row) < r_total)

    err = jnp.abs(depth - gt)
    term = jnp.where(err < delta, 0.5 * err * err, err - 0.5 * delta)
    term = jnp.where(mask, term, 0.0)
    cnt = mask.astype(jnp.float32)

    acc_rows = acc_sum.shape[0]
    if acc_rows != r_tile:
        # Fold the block down to (8, 128) with cross-vreg VPU adds only
        # (reshape splits the sublane-major dim, so it stays tile-aligned).
        term = term.reshape(r_tile // acc_rows, acc_rows, term.shape[-1]).sum(axis=0)
        cnt = cnt.reshape(r_tile // acc_rows, acc_rows, cnt.shape[-1]).sum(axis=0)

    acc_sum[...] += term
    acc_cnt[...] += cnt

    @pl.when(j == pl.num_programs(1) - 1)
    def _finalize():
        # Single cross-lane/sublane reduce per batch element.
        psum_ref[0] = jnp.sum(acc_sum[...], keepdims=True)
        pcnt_ref[0] = jnp.sum(acc_cnt[...], keepdims=True)


def huber_loss(outputs, gt, input=None, epoch=0, *, delta=10.0, mask_intersec=None):
    """Pallas TPU equivalent of Huber_loss.forward.

    outputs: (N, C, H, W) float; only channel 0 is used.
    gt:      (N, 1, H, W) float; mask = gt > 0.
    `input`, `epoch`, `mask_intersec` are unused by the torch forward and kept
    only for signature fidelity.  Empty mask -> NaN (matches torch).
    """
    N, C, H, W = outputs.shape
    assert gt.shape == (N, 1, H, W)
    L = H * W

    if L % _LANE == 0:
        # Main path: free reshapes only; channel-0 selection happens in the
        # BlockSpec, so channels 1..C-1 are never read from HBM.
        depth4 = outputs.reshape(N, C, L // _LANE, _LANE)
        gt4 = gt.reshape(N, 1, L // _LANE, _LANE)
    else:
        # TODO(synk): ragged H*W path still does one fused slice+pad copy of
        # the depth channel; gt padding is 0 so the mask excludes it.
        lp = _round_up(L, _LANE)
        depth = outputs[:, 0:1, :, :].reshape(N, 1, L)
        depth4 = jnp.pad(depth, ((0, 0), (0, 0), (0, lp - L))).reshape(
            N, 1, lp // _LANE, _LANE)
        gt4 = jnp.pad(gt.reshape(N, 1, L), ((0, 0), (0, 0), (0, lp - L))).reshape(
            N, 1, lp // _LANE, _LANE)

    R = depth4.shape[2]
    r_tile = R if R <= _MAX_BLOCK_ROWS else _MAX_BLOCK_ROWS
    n_row_blocks = pl.cdiv(R, r_tile)
    acc_rows = 8 if (r_tile % 8 == 0) else r_tile

    depth_spec = pl.BlockSpec((None, None, r_tile, _LANE), lambda n, j: (n, 0, j, 0))
    gt_spec = pl.BlockSpec((None, None, r_tile, _LANE), lambda n, j: (n, 0, j, 0))
    out_spec = pl.BlockSpec((1, 1, 1), lambda n, j: (n, 0, 0))

    psum, pcnt = pl.pallas_call(
        functools.partial(_huber_kernel, delta=float(delta),
                          r_total=R, r_tile=r_tile),
        out_shape=(
            jax.ShapeDtypeStruct((N, 1, 1), jnp.float32),
            jax.ShapeDtypeStruct((N, 1, 1), jnp.float32),
        ),
        grid_spec=pltpu.PrefetchScalarGridSpec(
            num_scalar_prefetch=0,
            grid=(N, n_row_blocks),
            in_specs=[depth_spec, gt_spec],
            out_specs=(out_spec, out_spec),
            scratch_shapes=[
                pltpu.VMEM((acc_rows, _LANE), jnp.float32),
                pltpu.VMEM((acc_rows, _LANE), jnp.float32),
            ],
        ),
        compiler_params=pltpu.CompilerParams(
            dimension_semantics=("parallel", "arbitrary"),
        ),
    )(depth4, gt4)

    # Tiny final combine: N partials per output.
    return jnp.sum(psum) / jnp.sum(pcnt)


def _reference(outputs, gt, delta):
    depth = outputs[:, 0:1, :, :]
    err = jnp.abs(depth - gt)
    mask = gt > 0
    term = jnp.where(err < delta, 0.5 * err * err, err - 0.5 * delta)
    msum = jnp.sum(jnp.where(mask, term, 0.0))
    cnt = jnp.sum(mask.astype(jnp.float32))
    return msum / cnt


if __name__ == "__main__":
    key = jax.random.PRNGKey(0)
    k1, k2 = jax.random.split(key)

    N, H, W = 2, 16, 16
    # outputs: (N, 2, H, W) -> channel 0 is the depth prediction (only one used)
    outputs = jax.random.normal(k1, (N, 2, H, W), dtype=jnp.float32)
    # gt: (N, 1, H, W); roughly half <= 0 so the mask is exercised
    gt = jax.random.normal(k2, (N, 1, H, W), dtype=jnp.float32)
    inp = jnp.ones((N, 1, H, W), dtype=jnp.float32)  # unused by forward

    # delta=1.0 so both the quadratic and linear Huber branches are exercised.
    loss = huber_loss(outputs, gt, inp, epoch=0, delta=1.0)
    loss = jax.block_until_ready(loss)

    ref = _reference(outputs, gt, delta=1.0)
    assert jnp.allclose(loss, ref, rtol=1e-5, atol=1e-6), (loss, ref)

    print("KERNEL_OK")
</pallas_src>

<mosaic_0001>
module attributes {stable_mosaic.version = 11 : i64} {
  func.func @_huber_kernel(%arg0: i32, %arg1: i32, %arg2: memref<1x1x2x128xf32, #tpu.memory_space<vmem>>, %arg3: memref<1x1x2x128xf32, #tpu.memory_space<vmem>>, %arg4: memref<1x1x1xf32, #tpu.memory_space<vmem>>, %arg5: memref<1x1x1xf32, #tpu.memory_space<vmem>>, %arg6: memref<2x128xf32, #tpu.memory_space<vmem>>, %arg7: memref<2x128xf32, #tpu.memory_space<vmem>>) attributes {dimension_semantics = [#tpu.dimension_semantics<parallel>, #tpu.dimension_semantics<arbitrary>], iteration_bounds = array<i64: 2, 1>, scalar_prefetch = 0 : i64, scratch_operands = 2 : i64, tpu.core_type = #tpu.core_type<tc>, window_params = [{transform_indices = @transform_0, window_bounds = array<i64: 1, 1, 2, 128>}, {transform_indices = @transform_1, window_bounds = array<i64: 1, 1, 2, 128>}, {transform_indices = @transform_2, window_bounds = array<i64: 1, 1, 1>}, {transform_indices = @transform_3, window_bounds = array<i64: 1, 1, 1>}]} {
    %c0_i32 = arith.constant 0 : i32
    %0 = arith.cmpi eq, %arg1, %c0_i32 : i32
    %1 = arith.extui %0 : i1 to i32
    %c0_i32_0 = arith.constant 0 : i32
    %2 = arith.cmpi ne, %1, %c0_i32_0 : i32
    scf.if %2 {
      %cst_22 = arith.constant 0.000000e+00 : f32
      %32 = vector.broadcast %cst_22 : f32 to vector<2x128xf32>
      %c0_23 = arith.constant 0 : index
      %c0_24 = arith.constant 0 : index
      %33 = vector.load %arg6[%c0_23, %c0_24] : memref<2x128xf32, #tpu.memory_space<vmem>>, vector<2x128xf32>
      tpu.vector_store %arg6[%c0_23, %c0_24], %32 {strides = array<i32>} : memref<2x128xf32, #tpu.memory_space<vmem>>, vector<2x128xf32>,
      %cst_25 = arith.constant 0.000000e+00 : f32
      %34 = vector.broadcast %cst_25 : f32 to vector<2x128xf32>
      %c0_26 = arith.constant 0 : index
      %c0_27 = arith.constant 0 : index
      %35 = vector.load %arg7[%c0_26, %c0_27] : memref<2x128xf32, #tpu.memory_space<vmem>>, vector<2x128xf32>
      tpu.vector_store %arg7[%c0_26, %c0_27], %34 {strides = array<i32>} : memref<2x128xf32, #tpu.memory_space<vmem>>, vector<2x128xf32>,
    } else {
    }
    %c0 = arith.constant 0 : index
    %c0_1 = arith.constant 0 : index
    %c0_2 = arith.constant 0 : index
    %c0_3 = arith.constant 0 : index
    %3 = vector.load %arg2[%c0, %c0_1, %c0_2, %c0_3] : memref<1x1x2x128xf32, #tpu.memory_space<vmem>>, vector<1x1x2x128xf32>
    %4 = vector.shape_cast %3 : vector<1x1x2x128xf32> to vector<2x128xf32>
    %c0_4 = arith.constant 0 : index
    %c0_5 = arith.constant 0 : index
    %c0_6 = arith.constant 0 : index
    %c0_7 = arith.constant 0 : index
    %5 = vector.load %arg3[%c0_4, %c0_5, %c0_6, %c0_7] : memref<1x1x2x128xf32, #tpu.memory_space<vmem>>, vector<1x1x2x128xf32>
    %6 = vector.shape_cast %5 : vector<1x1x2x128xf32> to vector<2x128xf32>
    %cst = arith.constant 0.000000e+00 : f32
    %7 = vector.broadcast %cst : f32 to vector<2x128xf32>
    %8 = arith.cmpf ogt, %6, %7 : vector<2x128xf32>
    %9 = arith.subf %4, %6 : vector<2x128xf32>
    %10 = math.absf %9 : vector<2x128xf32>
    %cst_8 = arith.constant 1.000000e+00 : f32
    %11 = vector.broadcast %cst_8 : f32 to vector<2x128xf32>
    %12 = arith.cmpf olt, %10, %11 : vector<2x128xf32>
    %cst_9 = arith.constant 5.000000e-01 : f32
    %13 = vector.broadcast %cst_9 : f32 to vector<2x128xf32>
    %14 = arith.mulf %13, %10 : vector<2x128xf32>
    %15 = arith.mulf %14, %10 : vector<2x128xf32>
    %cst_10 = arith.constant 5.000000e-01 : f32
    %16 = vector.broadcast %cst_10 : f32 to vector<2x128xf32>
    %17 = arith.subf %10, %16 : vector<2x128xf32>
    %18 = arith.select %12, %15, %17 : vector<2x128xi1>, vector<2x128xf32>
    %cst_11 = arith.constant 0.000000e+00 : f32
    %19 = vector.broadcast %cst_11 : f32 to vector<2x128xf32>
    %20 = arith.select %8, %18, %19 : vector<2x128xi1>, vector<2x128xf32>
    %21 = arith.extui %8 : vector<2x128xi1> to vector<2x128xi32>
    %22 = arith.sitofp %21 : vector<2x128xi32> to vector<2x128xf32>
    %c0_12 = arith.constant 0 : index
    %c0_13 = arith.constant 0 : index
    %23 = vector.load %arg6[%c0_12, %c0_13] : memref<2x128xf32, #tpu.memory_space<vmem>>, vector<2x128xf32>
    %24 = arith.addf %23, %20 : vector<2x128xf32>
    %c0_14 = arith.constant 0 : index
    %c0_15 = arith.constant 0 : index
    %25 = vector.load %arg6[%c0_14, %c0_15] : memref<2x128xf32, #tpu.memory_space<vmem>>, vector<2x128xf32>
    tpu.vector_store %arg6[%c0_14, %c0_15], %24 {strides = array<i32>} : memref<2x128xf32, #tpu.memory_space<vmem>>, vector<2x128xf32>,
    %c0_16 = arith.constant 0 : index
    %c0_17 = arith.constant 0 : index
    %26 = vector.load %arg7[%c0_16, %c0_17] : memref<2x128xf32, #tpu.memory_space<vmem>>, vector<2x128xf32>
    %27 = arith.addf %26, %22 : vector<2x128xf32>
    %c0_18 = arith.constant 0 : index
    %c0_19 = arith.constant 0 : index
    %28 = vector.load %arg7[%c0_18, %c0_19] : memref<2x128xf32, #tpu.memory_space<vmem>>, vector<2x128xf32>
    tpu.vector_store %arg7[%c0_18, %c0_19], %27 {strides = array<i32>} : memref<2x128xf32, #tpu.memory_space<vmem>>, vector<2x128xf32>,
    %c0_i32_20 = arith.constant 0 : i32
    %29 = arith.cmpi eq, %arg1, %c0_i32_20 : i32
    %30 = arith.extui %29 : i1 to i32
    %c0_i32_21 = arith.constant 0 : i32
    %31 = arith.cmpi ne, %30, %c0_i32_21 : i32
    scf.if %31 {
      %c0_22 = arith.constant 0 : index
      %c0_23 = arith.constant 0 : index
      %32 = vector.load %arg6[%c0_22, %c0_23] : memref<2x128xf32, #tpu.memory_space<vmem>>, vector<2x128xf32>
      %33 = vector.shape_cast %32 : vector<2x128xf32> to vector<1x2x128xf32>
      %cst_24 = arith.constant dense<0.000000e+00> : vector<1xf32>
      %34 = vector.multi_reduction <add>, %33, %cst_24 [1, 2] : vector<1x2x128xf32> to vector<1xf32>
      %35 = vector.shape_cast %34 : vector<1xf32> to vector<1x1x1xf32>
      %36 = vector.extract %35[0, 0, 0] : f32 from vector<1x1x1xf32>
      %37 = vector.broadcast %36 : f32 to vector<1x1xf32>
      %c0_25 = arith.constant 0 : index
      %c0_26 = arith.constant 0 : index
      %c0_27 = arith.constant 0 : index
      %38 = vector.load %arg4[%c0_25, %c0_26, %c0_27] : memref<1x1x1xf32, #tpu.memory_space<vmem>>, vector<1x1x1xf32>
      %39 = vector.shape_cast %38 : vector<1x1x1xf32> to vector<1x1xf32>
      %40 = vector.shape_cast %37 : vector<1x1xf32> to vector<1x1x1xf32>
      tpu.vector_store %arg4[%c0_25, %c0_26, %c0_27], %40 {strides = array<i32>} : memref<1x1x1xf32, #tpu.memory_space<vmem>>, vector<1x1x1xf32>,
      %c0_28 = arith.constant 0 : index
      %c0_29 = arith.constant 0 : index
      %41 = vector.load %arg7[%c0_28, %c0_29] : memref<2x128xf32, #tpu.memory_space<vmem>>, vector<2x128xf32>
      %42 = vector.shape_cast %41 : vector<2x128xf32> to vector<1x2x128xf32>
      %cst_30 = arith.constant dense<0.000000e+00> : vector<1xf32>
      %43 = vector.multi_reduction <add>, %42, %cst_30 [1, 2] : vector<1x2x128xf32> to vector<1xf32>
      %44 = vector.shape_cast %43 : vector<1xf32> to vector<1x1x1xf32>
      %45 = vector.extract %44[0, 0, 0] : f32 from vector<1x1x1xf32>
      %46 = vector.broadcast %45 : f32 to vector<1x1xf32>
      %c0_31 = arith.constant 0 : index
      %c0_32 = arith.constant 0 : index
      %c0_33 = arith.constant 0 : index
      %47 = vector.load %arg5[%c0_31, %c0_32, %c0_33] : memref<1x1x1xf32, #tpu.memory_space<vmem>>, vector<1x1x1xf32>
      %48 = vector.shape_cast %47 : vector<1x1x1xf32> to vector<1x1xf32>
      %49 = vector.shape_cast %46 : vector<1x1xf32> to vector<1x1x1xf32>
      tpu.vector_store %arg5[%c0_31, %c0_32, %c0_33], %49 {strides = array<i32>} : memref<1x1x1xf32, #tpu.memory_space<vmem>>, vector<1x1x1xf32>,
    } else {
    }
    return
  }
  func.func @transform_0(%arg0: i32, %arg1: i32) -> (i32, i32, i32, i32) {
    %c0_i32 = arith.constant 0 : i32
    %c0_i32_0 = arith.constant 0 : i32
    %c0_i32_1 = arith.constant 0 : i32
    return %arg0, %c0_i32, %arg1, %c0_i32_0 : i32, i32, i32, i32
  }
  func.func @transform_1(%arg0: i32, %arg1: i32) -> (i32, i32, i32, i32) {
    %c0_i32 = arith.constant 0 : i32
    %c0_i32_0 = arith.constant 0 : i32
    %c0_i32_1 = arith.constant 0 : i32
    return %arg0, %c0_i32, %arg1, %c0_i32_0 : i32, i32, i32, i32
  }
  func.func @transform_2(%arg0: i32, %arg1: i32) -> (i32, i32, i32) {
    %c0_i32 = arith.constant 0 : i32
    %c0_i32_0 = arith.constant 0 : i32
    %c0_i32_1 = arith.constant 0 : i32
    return %arg0, %c0_i32, %c0_i32_0 : i32, i32, i32
  }
  func.func @transform_3(%arg0: i32, %arg1: i32) -> (i32, i32, i32) {
    %c0_i32 = arith.constant 0 : i32
    %c0_i32_0 = arith.constant 0 : i32
    %c0_i32_1 = arith.constant 0 : i32
    return %arg0, %c0_i32, %c0_i32_0 : i32, i32, i32
  }
}

</mosaic_0001>

<llo_original>
// kernel: tpu_custom_call.1
$region0: #{tpu_custom_call.1}
  #allocation0 [shape = 'u32[]', space=smem, size = 0x4, offset = 0x4, fixed_abs, tag = 'smem constant byte address 0x4 - core index']
  #allocation1 [shape = 'u32[144,128]{1,0:T(1,128)}', space=vmem, size = 0x12000, scoped, tag = 'internal scratch']
  #allocation2 [shape = 'f32[2,128]{1,0:T(2,128)}', space=vmem, size = 0x400, scoped, tag = 'scratch operand']
  #allocation3 [shape = 'f32[2,128]{1,0:T(2,128)}', space=vmem, size = 0x400, scoped, tag = 'scratch operand']
  %s0 = inlined_call_operand.hbm [shape: f32[2,2,2,128], index: 0, kind: input, shape index: {}]
  %s1 = inlined_call_operand.hbm [shape: f32[2,1,2,128], index: 1, kind: input, shape index: {}]
  %s2 = inlined_call_operand.vmem [shape: f32[2,1,1], index: 2, kind: output, shape index: {0}]
  %s3 = inlined_call_operand.vmem [shape: f32[2,1,1], index: 3, kind: output, shape index: {1}]
  %4 = xla_tuple %s2, %s3
  %s5 = sld [smem:[#allocation0]]
  $region65: #{tpu_custom_call.1} parent=0
    _
  %s7 = ssub.s32 1, %s5
  %s8 = scalar_select 0, %s7, %s5
  $region1: #{tpu_custom_call.1} parent=0
    #allocation4 [shape = 'u8[2048]{0}', space=vmem, size = 0x800, scoped, tag = 'input window, operand 0']
    #allocation5 [shape = 's32[2]{0}', space=sflag, size = 0x8, scoped, tag = 'scoped memory for tpu_custom_call.1']
    #allocation6 [shape = 'u8[2048]{0}', space=vmem, size = 0x800, scoped, tag = 'input window, operand 1']
    #allocation7 [shape = 's32[2]{0}', space=sflag, size = 0x8, scoped, tag = 'scoped memory for tpu_custom_call.1']
    %9 = vsyncpa [#allocation5], 0
    %s10 = scalar_lea.sflag [#allocation5], 1
    %11 = vsyncpa %s10, 0
    %12 = vsyncpa [#allocation7], 0
    %s13 = scalar_lea.sflag [#allocation7], 1
    %14 = vsyncpa %s13, 0
    loop: start=0, step=1, limit=4
    $region2: #{tpu_custom_call.1} parent=1 // loop_pre_header
      _
    $region3: #{tpu_custom_call.1} parent=1 // loop_header
      %s16 = sphi 0, %s20
      %p17 = scmp.ge.s32.totalorder %s16, 4
      %s23 = sphi 0, %s35
      %s24 = sphi 0, %s31
      %s25 = sphi 0, %s23
      %s26 = sphi 0, %s24
      %s27 = sphi 0, %s25
      %s28 = sphi 0, %s26
      %s40 = sphi 0, %s42
      %s43 = sphi 0, %s40
      %s44 = sphi 0, %s43
      %s60 = sphi 0, %s44
      %s68 = sphi 0, %s70
      %s71 = sphi 0, %s68
      %s72 = sphi 0, %s71
      %s88 = sphi 0, %s72
      %s94 = sphi 0, %s96
      %s97 = sphi 0, %s94
      %s98 = sphi 0, %s97
      %s114 = sphi 0, %s98
      %s120 = sphi 0, %s122
      %s123 = sphi 0, %s120
      %s124 = sphi 0, %s123
      %s140 = sphi 0, %s124
    $region4: #{tpu_custom_call.1} parent=1 // loop_header_branch
      %19 = sbr.rel (%p17) target = $region8
    $region5: #{tpu_custom_call.1} parent=1 // loop_body
      %s21 = ssub.s32 %s16, 1
      %s22 = ssub.s32 %s16, 2
      %s29 = sadd.s32 1, %s24
      %p30 = scmp.ge.s32.totalorder %s29, 1
      %s31 = scalar_select %p30, 0, %s29
      %s32 = sadd.s32 1, %s23
      %s33 = scalar_select %p30, %s32, %s23
      %p34 = scmp.ge.s32.totalorder %s33, 2
      %s35 = scalar_select %p34, 0, %s33
      %s36 = ssub.s32 %s23, %s35
      %s37 = ssub.s32 %s24, %s31
      %s38 = sor.u32 %s36, %s37
      %p39 = scmp.eq.s32.totalorder %s38, 0
      %s41 = sadd.s32 %s40, 1
      %s42 = scalar_select %p39, %s40, %s41
      %p45 = pneg %p39
      %p46 = scmp.eq.s32.totalorder %s16, 1
      %p47 = por %p45, %p46
      %p48 = scmp.ne.s32.totalorder %s40, %s43
      %p49 = scmp.eq.s32.totalorder %s16, 0
      %p50 = por %p48, %p49
      %p51 = scmp.ne.s32.totalorder %s40, %s43
      %p52 = scmp.eq.s32.totalorder %s21, 1
      %p53 = por %p51, %p52
      %p54 = scmp.ne.s32.totalorder %s43, %s44
      %p55 = scmp.eq.s32.totalorder %s21, 0
      %p56 = por %p54, %p55
      %p57 = scmp.ne.s32.totalorder %s43, %s44
      %p58 = scmp.eq.s32.totalorder %s22, 1
      %p59 = por %p57, %p58
      %p61 = scmp.ne.s32.totalorder %s44, %s60
      %p62 = scmp.eq.s32.totalorder %s22, 0
      %p63 = por %p61, %p62
      %s64 = ssub.s32 %s23, %s35
      %s65 = ssub.s32 %s24, %s31
      %s66 = sor.u32 %s64, %s65
      %p67 = scmp.eq.s32.totalorder %s66, 0
      %s69 = sadd.s32 %s68, 1
      %s70 = scalar_select %p67, %s68, %s69
      %p73 = pneg %p67
      %p74 = scmp.eq.s32.totalorder %s16, 1
      %p75 = por %p73, %p74
      %p76 = scmp.ne.s32.totalorder %s68, %s71
      %p77 = scmp.eq.s32.totalorder %s16, 0
      %p78 = por %p76, %p77
      %p79 = scmp.ne.s32.totalorder %s68, %s71
      %p80 = scmp.eq.s32.totalorder %s21, 1
      %p81 = por %p79, %p80
      %p82 = scmp.ne.s32.totalorder %s71, %s72
      %p83 = scmp.eq.s32.totalorder %s21, 0
      %p84 = por %p82, %p83
      %p85 = scmp.ne.s32.totalorder %s71, %s72
      %p86 = scmp.eq.s32.totalorder %s22, 1
      %p87 = por %p85, %p86
      %p89 = scmp.ne.s32.totalorder %s72, %s88
      %p90 = scmp.eq.s32.totalorder %s22, 0
      %p91 = por %p89, %p90
      %s92 = ssub.s32 %s23, %s35
      %p93 = scmp.eq.s32.totalorder %s92, 0
      %s95 = sadd.s32 %s94, 1
      %s96 = scalar_select %p93, %s94, %s95
      %p99 = pneg %p93
      %p100 = scmp.eq.s32.totalorder %s16, 1
      %p101 = por %p99, %p100
      %p102 = scmp.ne.s32.totalorder %s94, %s97
      %p103 = scmp.eq.s32.totalorder %s16, 0
      %p104 = por %p102, %p103
      %p105 = scmp.ne.s32.totalorder %s94, %s97
      %p106 = scmp.eq.s32.totalorder %s21, 1
      %p107 = por %p105, %p106
      %p108 = scmp.ne.s32.totalorder %s97, %s98
      %p109 = scmp.eq.s32.totalorder %s21, 0
      %p110 = por %p108, %p109
      %p111 = scmp.ne.s32.totalorder %s97, %s98
      %p112 = scmp.eq.s32.totalorder %s22, 1
      %p113 = por %p111, %p112
      %p115 = scmp.ne.s32.totalorder %s98, %s114
      %p116 = scmp.eq.s32.totalorder %s22, 0
      %p117 = por %p115, %p116
      %s118 = ssub.s32 %s23, %s35
      %p119 = scmp.eq.s32.totalorder %s118, 0
      %s121 = sadd.s32 %s120, 1
      %s122 = scalar_select %p119, %s120, %s121
      %p125 = pneg %p119
      %p126 = scmp.eq.s32.totalorder %s16, 1
      %p127 = por %p125, %p126
      %p128 = scmp.ne.s32.totalorder %s120, %s123
      %p129 = scmp.eq.s32.totalorder %s16, 0
      %p130 = por %p128, %p129
      %p131 = scmp.ne.s32.totalorder %s120, %s123
      %p132 = scmp.eq.s32.totalorder %s21, 1
      %p133 = por %p131, %p132
      %p134 = scmp.ne.s32.totalorder %s123, %s124
      %p135 = scmp.eq.s32.totalorder %s21, 0
      %p136 = por %p134, %p135
      %p137 = scmp.ne.s32.totalorder %s123, %s124
      %p138 = scmp.eq.s32.totalorder %s22, 1
      %p139 = por %p137, %p138
      %p141 = scmp.ne.s32.totalorder %s124, %s140
      %p142 = scmp.eq.s32.totalorder %s22, 0
      %p143 = por %p141, %p142
      %p144 = scmp.le.s32.totalorder 1, %s16
      %p145 = scmp.lt.s32.totalorder %s16, 3
      %p146 = pnand %p144, %p145
      %p147 = pneg %p146
      // Predicated region
      $region9: #{tpu_custom_call.1} parent=5 // pred_check
        _
      $region10: #{tpu_custom_call.1} parent=5 // pred_check_branch
        %149 = sbr.rel (%p146) target = $region12
      $region11: #{tpu_custom_call.1} parent=5 // pred_region
        %s150 = ssub.s32 %s16, 1
      $region12: #{tpu_custom_call.1} parent=5 // pred_fallthru
        _
      %p151 = scmp.lt.s32.totalorder %s16, 2
      // Predicated region
      $region13: #{tpu_custom_call.1} parent=5 // pred_check
        %p152 = pneg %p151
      $region14: #{tpu_custom_call.1} parent=5 // pred_check_branch
        %154 = sbr.rel (%p152) target = $region16
      $region15: #{tpu_custom_call.1} parent=5 // pred_region
        // Predicated region
        $region17: #{tpu_custom_call.1} parent=15 // pred_check
          %p155 = pneg %p50
        $region18: #{tpu_custom_call.1} parent=15 // pred_check_branch
          %157 = sbr.rel (%p155) target = $region20
        $region19: #{tpu_custom_call.1} parent=15 // pred_region
          %s158 = sand.u32 %s40, 1
          %s159 = scalar_lea.sflag [#allocation5], %s158
          %s160 = sand.u32 %s40, 1
          %s161 = smul.addr %s160, 2
          %s162 = scalar_lea.vmem [#allocation4], %s161
          %s164 = ssub.s32 32, 32
          %165 = vsyncadd %s159, %s164
          %s166 = smul.addr %s23, 2
          %s167 = sadd.s32 %s24, %s166
          %s168 = smul.addr %s167, 32
          %s169 = scalar_lea.hbm %s0, %s168
          %s171 = sshll.u32 %s162, 4
          %s172 = int_to_ptr.vmem [resolvable:$true] %s171
          %174 = dma.hbm_to_vmem [thread:$0]  %s169, 32, %s172, %s159
        $region20: #{tpu_custom_call.1} parent=15 // pred_fallthru
          _
        // Predicated region
        $region21: #{tpu_custom_call.1} parent=15 // pred_check
          %p175 = pneg %p78
        $region22: #{tpu_custom_call.1} parent=15 // pred_check_branch
          %177 = sbr.rel (%p175) target = $region24
        $region23: #{tpu_custom_call.1} parent=15 // pred_region
          %s178 = sand.u32 %s68, 1
          %s179 = scalar_lea.sflag [#allocation7], %s178
          %s180 = sand.u32 %s68, 1
          %s181 = smul.addr %s180, 2
          %s182 = scalar_lea.vmem [#allocation6], %s181
          %s184 = ssub.s32 32, 32
          %185 = vsyncadd %s179, %s184
          %s186 = sadd.s32 %s24, %s23
          %s187 = smul.addr %s186, 32
          %s188 = scalar_lea.hbm %s1, %s187
          %s190 = sshll.u32 %s182, 4
          %s191 = int_to_ptr.vmem [resolvable:$true] %s190
          %193 = dma.hbm_to_vmem [thread:$0]  %s188, 32, %s191, %s179
        $region24: #{tpu_custom_call.1} parent=15 // pred_fallthru
          _
      $region16: #{tpu_custom_call.1} parent=5 // pred_fallthru
        _
      %p194 = scmp.le.s32.totalorder 1, %s16
      %p195 = scmp.lt.s32.totalorder %s16, 3
      %p196 = pnand %p194, %p195
      %p197 = pneg %p196
      // Predicated region
      $region25: #{tpu_custom_call.1} parent=5 // pred_check
        _
      $region26: #{tpu_custom_call.1} parent=5 // pred_check_branch
        %199 = sbr.rel (%p196) target = $region28
      $region27: #{tpu_custom_call.1} parent=5 // pred_region
        %s200 = ssub.s32 %s16, 1
        %s201 = sand.u32 %s43, 1
        %s202 = scalar_lea.sflag [#allocation5], %s201
        %s203 = sand.u32 %s43, 1
        %s204 = smul.addr %s203, 2
        %s205 = scalar_lea.vmem [#allocation4], %s204
        // Predicated region
        $region29: #{tpu_custom_call.1} parent=27 // pred_check
          %p206 = pneg %p56
        $region30: #{tpu_custom_call.1} parent=27 // pred_check_branch
          %208 = sbr.rel (%p206) target = $region32
        $region31: #{tpu_custom_call.1} parent=27 // pred_region
          %209 = dma.done %s202, 32
        $region32: #{tpu_custom_call.1} parent=27 // pred_fallthru
          _
        %s210 = sand.u32 %s71, 1
        %s211 = scalar_lea.sflag [#allocation7], %s210
        %s212 = sand.u32 %s71, 1
        %s213 = smul.addr %s212, 2
        %s214 = scalar_lea.vmem [#allocation6], %s213
        // Predicated region
        $region33: #{tpu_custom_call.1} parent=27 // pred_check
          %p215 = pneg %p84
        $region34: #{tpu_custom_call.1} parent=27 // pred_check_branch
          %217 = sbr.rel (%p215) target = $region36
        $region35: #{tpu_custom_call.1} parent=27 // pred_region
          %218 = dma.done %s211, 32
        $region36: #{tpu_custom_call.1} parent=27 // pred_fallthru
          _
        %s219 = sand.u32 %s43, 1
        %s220 = scalar_lea.sflag [#allocation5], %s219
        %s221 = sand.u32 %s43, 1
        %s222 = smul.addr %s221, 2
        %s223 = scalar_lea.vmem [#allocation4], %s222
        %p224 = pneg %p56
        %p225 = pneg %p53
        %s226 = sand.u32 %s71, 1
        %s227 = scalar_lea.sflag [#allocation7], %s226
        %s228 = sand.u32 %s71, 1
        %s229 = smul.addr %s228, 2
        %s230 = scalar_lea.vmem [#allocation6], %s229
        %p231 = pneg %p84
        %p232 = pneg %p81
        %p233 = pneg %p110
        %p234 = pneg %p107
        %p235 = scmp.lt.s32.totalorder %s25, 1
        %s236 = scalar_select %p235, %s25, 1
        %s237 = scalar_lea.vmem %s2, %s236
        %p238 = pneg %p136
        %p239 = pneg %p133
        %p240 = scmp.lt.s32.totalorder %s25, 1
        %s241 = scalar_select %p240, %s25, 1
        %s242 = scalar_lea.vmem %s3, %s241
        %p243 = scmp.lt.s32.totalorder %s25, 1
        %s244 = scalar_select %p243, %s25, 1
        %s245 = scalar_lea.vmem %s2, %s244
        %p246 = scmp.lt.s32.totalorder %s25, 1
        %s247 = scalar_select %p246, %s25, 1
        %s248 = scalar_lea.vmem %s3, %s247
        %p249 = scmp.eq.s32.totalorder %s26, 0
        // Predicated region
        $region37: #{tpu_custom_call.1} parent=27 // pred_check
          %p250 = pneg %p249
        $region38: #{tpu_custom_call.1} parent=27 // pred_check_branch
          %252 = sbr.rel (%p250) target = $region40
        $region39: #{tpu_custom_call.1} parent=27 // pred_region
          %253 = vst [vmem:[#allocation2] sm:$0x3] 0.0
          %254 = vst [vmem:[#allocation3] sm:$0x3] 0.0
        $region40: #{tpu_custom_call.1} parent=27 // pred_fallthru
          _
        %v255 = vld [vmem:[%s205] sm:$0x3]
        %v256 = vld [vmem:[%s214] sm:$0x3]
        %vm257 = vcmp.gt.f32.partialorder %v256, 0.0
        %v258 = vsub.f32 %v255, %v256
        %v259 = vand.u32 2147483647, %v258
        %vm260 = vcmp.lt.f32.partialorder %v259, 1.0
        %v261 = vmul.f32 %v259, 0.5
        %v262 = vmul.f32 %v261, %v259
        %v263 = vsub.f32 %v259, 0.5
        %v264 = vsel %vm260, %v262, %v263
        %v265 = vsel %vm257, %v264, 0.0
        %v266 = vsel %vm257, 1, 0
        %v267 = vcvt.s32.f32 %v266
        %v268 = vld [vmem:[#allocation2] sm:$0x3]
        %v269 = vadd.f32 %v268, %v265
        %270 = vst [vmem:[#allocation2] sm:$0x3] %v269
        %v271 = vld [vmem:[#allocation3] sm:$0x3]
        %v272 = vadd.f32 %v271, %v267
        %273 = vst [vmem:[#allocation3] sm:$0x3] %v272
        // Predicated region
        $region41: #{tpu_custom_call.1} parent=27 // pred_check
          %p274 = pneg %p249
        $region42: #{tpu_custom_call.1} parent=27 // pred_check_branch
          %276 = sbr.rel (%p274) target = $region44
        $region43: #{tpu_custom_call.1} parent=27 // pred_region
          %v277 = vld [vmem:[#allocation2] sm:$0x3]
          %vm278 = vcmask 1041408
          %v279 = vsel %vm278, %v277, 0.0
          %280 = vadd.xlane.f32.xlu0 %v279
          %v281 = vpop.xlane.xlu0 %280
          %v282 = vrot.slane %v281, 4
          %v283 = vadd.f32 %v281, %v282
          %v284 = vrot.slane %v283, 2
          %v285 = vadd.f32 %v283, %v284
          %v286 = vrot.slane %v285, 1
          %v287 = vadd.f32 %v285, %v286
          %s288 = vtos %v287
          %v289 = vstv %s288
          %vm290 = vcmask 0
          %291 = vst.msk [vmem:[%s245] sm:$0x1] %vm290, %v289
          %v292 = vld [vmem:[#allocation3] sm:$0x3]
          %v293 = vsel %vm278, %v292, 0.0
          %294 = vadd.xlane.f32.xlu0 %v293
          %v295 = vpop.xlane.xlu0 %294
          %v296 = vrot.slane %v295, 4
          %v297 = vadd.f32 %v295, %v296
          %v298 = vrot.slane %v297, 2
          %v299 = vadd.f32 %v297, %v298
          %v300 = vrot.slane %v299, 1
          %v301 = vadd.f32 %v299, %v300
          %s302 = vtos %v301
          %v303 = vstv %s302
          %304 = vst.msk [vmem:[%s248] sm:$0x1] %vm290, %v303
        $region44: #{tpu_custom_call.1} parent=27 // pred_fallthru
          _
        %p305 = scmp.lt.s32.totalorder %s25, 1
        %s306 = scalar_select %p305, %s25, 1
        %s307 = scalar_lea.vmem %s2, %s306
        %p308 = scmp.lt.s32.totalorder %s25, 1
        %s309 = scalar_select %p308, %s25, 1
        %s310 = scalar_lea.vmem %s3, %s309
        // Predicated region
        $region45: #{tpu_custom_call.1} parent=27 // pred_check
          %p311 = pneg %p107
        $region46: #{tpu_custom_call.1} parent=27 // pred_check_branch
          %313 = sbr.rel (%p311) target = $region48
        $region47: #{tpu_custom_call.1} parent=27 // pred_region
          _
        $region48: #{tpu_custom_call.1} parent=27 // pred_fallthru
          _
        // Predicated region
        $region49: #{tpu_custom_call.1} parent=27 // pred_check
          %p314 = pneg %p133
        $region50: #{tpu_custom_call.1} parent=27 // pred_check_branch
          %316 = sbr.rel (%p314) target = $region52
        $region51: #{tpu_custom_call.1} parent=27 // pred_region
          _
        $region52: #{tpu_custom_call.1} parent=27 // pred_fallthru
          _
      $region28: #{tpu_custom_call.1} parent=5 // pred_fallthru
        _
      %p317 = scmp.le.s32.totalorder 2, %s16
      // Predicated region
      $region53: #{tpu_custom_call.1} parent=5 // pred_check
        %p318 = pneg %p317
      $region54: #{tpu_custom_call.1} parent=5 // pred_check_branch
        %320 = sbr.rel (%p318) target = $region56
      $region55: #{tpu_custom_call.1} parent=5 // pred_region
        %s321 = ssub.s32 %s16, 2
        // Predicated region
        $region57: #{tpu_custom_call.1} parent=55 // pred_check
          %p322 = pneg %p113
        $region58: #{tpu_custom_call.1} parent=55 // pred_check_branch
          %324 = sbr.rel (%p322) target = $region60
        $region59: #{tpu_custom_call.1} parent=55 // pred_region
          %p325 = scmp.lt.s32.totalorder %s27, 1
          %s326 = scalar_select %p325, %s27, 1
          %s327 = scalar_lea.vmem %s2, %s326
        $region60: #{tpu_custom_call.1} parent=55 // pred_fallthru
          _
        // Predicated region
        $region61: #{tpu_custom_call.1} parent=55 // pred_check
          %p328 = pneg %p139
        $region62: #{tpu_custom_call.1} parent=55 // pred_check_branch
          %330 = sbr.rel (%p328) target = $region64
        $region63: #{tpu_custom_call.1} parent=55 // pred_region
          %p331 = scmp.lt.s32.totalorder %s27, 1
          %s332 = scalar_select %p331, %s27, 1
          %s333 = scalar_lea.vmem %s3, %s332
        $region64: #{tpu_custom_call.1} parent=55 // pred_fallthru
          _
      $region56: #{tpu_custom_call.1} parent=5 // pred_fallthru
        _
    $region6: #{tpu_custom_call.1} parent=1 // loop_footer
      %s20 = sadd.s32 1, %s16
    $region7: #{tpu_custom_call.1} parent=1 // loop_footer_branch
      %15 = sbr.rel target = $region3
    $region8: #{tpu_custom_call.1} parent=1 // loop_exit
      _
    %334 = vsyncpa [#allocation5], 1
    %s335 = scalar_lea.sflag [#allocation5], 1
    %336 = vsyncpa %s335, 1
    %337 = vsyncpa [#allocation7], 1
    %s338 = scalar_lea.sflag [#allocation7], 1
    %339 = vsyncpa %s338, 1

</llo_original>
